<compile_context>
chip_gen: v7x
topology: tpu7x:2x2x1
jax: 0.10.0
libtpu: 0.0.40
codegen_flags: <defaults>
</compile_context>

<pallas_src>
import jax
import jax.numpy as jnp
from jax.experimental import pallas as pl
from jax.experimental.pallas import tpu as pltpu


def _gelu_exact(x):
    # matches torch.nn.GELU() default (erf-based, not tanh approximation)
    # TODO(synk): original module uses get_activation(act); GELU assumed here.
    return 0.5 * x * (1.0 + jax.lax.erf(x / jnp.sqrt(2.0).astype(x.dtype)))


def adapter_kernel(x_ref, res_ref, aw_ref, ab_ref, bw_ref, bb_ref, o_ref):
    x = x_ref[...]                                                      # (TM, dim)
    # First projection: (TM, dim) @ (dim, r_pad) on the MXU, f32 accumulation.
    h = jnp.dot(x, aw_ref[...], preferred_element_type=jnp.float32)    # (TM, r_pad)
    h = h + ab_ref[...].astype(jnp.float32)                            # bias broadcast
    h = _gelu_exact(h)                                                 # activation (f32)
    # Second projection: (TM, r_pad) @ (r_pad, dim), f32 accumulation.
    out = jnp.dot(h.astype(bw_ref.dtype), bw_ref[...],
                  preferred_element_type=jnp.float32)                  # (TM, dim)
    out = out + bb_ref[...].astype(jnp.float32)
    out = out + res_ref[...].astype(jnp.float32)                       # residual add
    o_ref[...] = out.astype(o_ref.dtype)


def _round_up(x, m):
    return ((x + m - 1) // m) * m


def _choose_tm(M, dim, itemsize):
    # Keep the three streamed (TM, dim) tiles (x, residual, out), double-buffered,
    # within ~24 MiB so the kernel fits v7x's smaller VMEM with room for weights.
    budget = 24 * 1024 * 1024
    tm = budget // (6 * dim * itemsize)
    tm = max(8, min(512, int(tm)))
    tm = (tm // 8) * 8
    return min(tm, _round_up(M, 8))


def adapter_forward(x, residual, a_w, a_b, b_w, b_b):
    """x, residual: (B, S, dim). a_w: (r, dim), a_b: (r,), b_w: (dim, r), b_b: (dim,).

    Weight convention follows torch.nn.Linear (out_features, in_features);
    we transpose once in the wrapper so the kernel does row-major matmuls.
    """
    B, S, dim = x.shape
    r = a_w.shape[0]
    M = B * S
    itemsize = jnp.dtype(x.dtype).itemsize

    # --- layout prep in the wrapper (one-time, outside the kernel) ---
    x2 = x.reshape(M, dim)
    res2 = residual.reshape(M, dim)
    aw_t = a_w.T                      # (dim, r)
    bw_t = b_w.T                      # (r, dim)
    ab2 = a_b.reshape(1, r)
    bb2 = b_b.reshape(1, dim)

    # Pad rank r up to a multiple of 128 -> lane-dense intermediate, full MXU width.
    # Zero padding is exact: extra h columns are gelu(0)=0 and hit zero rows of bw_t.
    r_pad = _round_up(r, 128)
    if r_pad != r:
        aw_t = jnp.pad(aw_t, ((0, 0), (0, r_pad - r)))
        ab2 = jnp.pad(ab2, ((0, 0), (0, r_pad - r)))
        bw_t = jnp.pad(bw_t, ((0, r_pad - r), (0, 0)))

    # Row tiling: pad M up to a multiple of TM; padded rows are sliced off afterwards.
    TM = _choose_tm(M, dim, itemsize)
    M_pad = _round_up(M, TM)
    if M_pad != M:
        x2 = jnp.pad(x2, ((0, M_pad - M), (0, 0)))
        res2 = jnp.pad(res2, ((0, M_pad - M), (0, 0)))

    grid = (M_pad // TM,)

    row_spec = pl.BlockSpec((TM, dim), lambda i: (i, 0))        # streamed per tile
    const = lambda shape: pl.BlockSpec(shape, lambda i: (0, 0))  # VMEM-resident

    w_itemsize = jnp.dtype(aw_t.dtype).itemsize
    est_vmem = (6 * TM * dim * itemsize                           # x/res/out, 2 bufs each
                + 2 * (2 * dim * r_pad + r_pad + dim) * w_itemsize  # weights + biases
                + 2 * TM * r_pad * 4)                             # intermediate headroom
    vmem_limit = min(64 * 1024 * 1024, max(32 * 1024 * 1024, 2 * int(est_vmem)))

    out = pl.pallas_call(
        adapter_kernel,
        out_shape=jax.ShapeDtypeStruct((M_pad, dim), x.dtype),
        grid=grid,
        in_specs=[
            row_spec,                    # x tile
            row_spec,                    # residual tile
            const((dim, r_pad)),         # A weight (transposed, padded)
            const((1, r_pad)),           # A bias (padded)
            const((r_pad, dim)),         # B weight (transposed, padded)
            const((1, dim)),             # B bias
        ],
        out_specs=row_spec,
        compiler_params=pltpu.CompilerParams(
            dimension_semantics=("parallel",),   # independent row tiles; v7x megacore
            vmem_limit_bytes=vmem_limit,
        ),
    )(x2, res2, aw_t, ab2, bw_t, bb2)

    if M_pad != M:
        out = out[:M]
    return out.reshape(B, S, dim)


def adapter_reference(x, residual, a_w, a_b, b_w, b_b):
    h = jnp.einsum("bsd,rd->bsr", x, a_w) + a_b
    h = _gelu_exact(h)
    o = jnp.einsum("bsr,dr->bsd", h, b_w) + b_b
    return o + residual


if __name__ == "__main__":
    # Small shapes consistent with the module: x is (batch, seq, hidden)
    B, S, dim, r = 2, 8, 32, 16

    key = jax.random.PRNGKey(0)
    k_x, k_res, k_aw, k_ab, k_bw, k_bb = jax.random.split(key, 6)

    x = jax.random.normal(k_x, (B, S, dim), dtype=jnp.float32)
    residual = jax.random.normal(k_res, (B, S, dim), dtype=jnp.float32)

    # Deterministic init mimicking nn.Linear: uniform(-1/sqrt(fan_in), +1/sqrt(fan_in))
    bound_a = 1.0 / jnp.sqrt(dim)
    bound_b = 1.0 / jnp.sqrt(r)
    a_w = jax.random.uniform(k_aw, (r, dim), minval=-bound_a, maxval=bound_a, dtype=jnp.float32)
    a_b = jax.random.uniform(k_ab, (r,), minval=-bound_a, maxval=bound_a, dtype=jnp.float32)
    b_w = jax.random.uniform(k_bw, (dim, r), minval=-bound_b, maxval=bound_b, dtype=jnp.float32)
    b_b = jax.random.uniform(k_bb, (dim,), minval=-bound_b, maxval=bound_b, dtype=jnp.float32)

    out = adapter_forward(x, residual, a_w, a_b, b_w, b_b)
    out = jax.block_until_ready(out)

    ref = adapter_reference(x, residual, a_w, a_b, b_w, b_b)
    assert out.shape == (B, S, dim)
    assert jnp.allclose(out, ref, atol=1e-5, rtol=1e-5), "mismatch vs reference"

    print("KERNEL_OK")
</pallas_src>

<mosaic_0001>
module attributes {stable_mosaic.version = 11 : i64} {
  func.func @adapter_kernel(%arg0: i32, %arg1: memref<16x32xf32, #tpu.memory_space<vmem>>, %arg2: memref<16x32xf32, #tpu.memory_space<vmem>>, %arg3: memref<32x128xf32, #tpu.memory_space<vmem>>, %arg4: memref<1x128xf32, #tpu.memory_space<vmem>>, %arg5: memref<128x32xf32, #tpu.memory_space<vmem>>, %arg6: memref<1x32xf32, #tpu.memory_space<vmem>>, %arg7: memref<16x32xf32, #tpu.memory_space<vmem>>) attributes {dimension_semantics = [#tpu.dimension_semantics<parallel>], iteration_bounds = array<i64: 1>, scalar_prefetch = 0 : i64, scratch_operands = 0 : i64, tpu.core_type = #tpu.core_type<tc>, window_params = [{transform_indices = @transform_0, window_bounds = array<i64: 16, 32>}, {transform_indices = @transform_1, window_bounds = array<i64: 16, 32>}, {pipeline_mode = #tpu.pipeline_mode<synchronous>, transform_indices = @transform_2, window_bounds = array<i64: 32, 128>}, {pipeline_mode = #tpu.pipeline_mode<synchronous>, transform_indices = @transform_3, window_bounds = array<i64: 1, 128>}, {pipeline_mode = #tpu.pipeline_mode<synchronous>, transform_indices = @transform_4, window_bounds = array<i64: 128, 32>}, {pipeline_mode = #tpu.pipeline_mode<synchronous>, transform_indices = @transform_5, window_bounds = array<i64: 1, 32>}, {transform_indices = @transform_6, window_bounds = array<i64: 16, 32>}]} {
    %c0 = arith.constant 0 : index
    %c0_0 = arith.constant 0 : index
    %0 = vector.load %arg1[%c0, %c0_0] : memref<16x32xf32, #tpu.memory_space<vmem>>, vector<16x32xf32>
    %c0_1 = arith.constant 0 : index
    %c0_2 = arith.constant 0 : index
    %1 = vector.load %arg3[%c0_1, %c0_2] : memref<32x128xf32, #tpu.memory_space<vmem>>, vector<32x128xf32>
    %cst = arith.constant dense<0.000000e+00> : vector<16x128xf32>
    %2 = tpu.matmul %0, %1, %cst {dimension_numbers = #tpu.dot_dimension_numbers<[1], [0], [0], [1], [0, 0, 1, 1], [], []>} : vector<16x32xf32>, vector<32x128xf32>, vector<16x128xf32> -> vector<16x128xf32>
    %c0_3 = arith.constant 0 : index
    %c0_4 = arith.constant 0 : index
    %3 = vector.load %arg4[%c0_3, %c0_4] : memref<1x128xf32, #tpu.memory_space<vmem>>, vector<1x128xf32>
    %4 = vector.broadcast %3 : vector<1x128xf32> to vector<16x128xf32>
    %5 = arith.addf %2, %4 : vector<16x128xf32>
    %cst_5 = arith.constant 5.000000e-01 : f32
    %6 = vector.broadcast %cst_5 : f32 to vector<16x128xf32>
    %7 = arith.mulf %6, %5 : vector<16x128xf32>
    %cst_6 = arith.constant 2.000000e+00 : f32
    %8 = math.sqrt %cst_6 : f32
    %9 = vector.broadcast %8 : f32 to vector<16x128xf32>
    %10 = arith.divf %5, %9 : vector<16x128xf32>
    %11 = math.erf %10 : vector<16x128xf32>
    %cst_7 = arith.constant 1.000000e+00 : f32
    %12 = vector.broadcast %cst_7 : f32 to vector<16x128xf32>
    %13 = arith.addf %12, %11 : vector<16x128xf32>
    %14 = arith.mulf %7, %13 : vector<16x128xf32>
    %c0_8 = arith.constant 0 : index
    %c0_9 = arith.constant 0 : index
    %15 = vector.load %arg5[%c0_8, %c0_9] : memref<128x32xf32, #tpu.memory_space<vmem>>, vector<128x32xf32>
    %cst_10 = arith.constant dense<0.000000e+00> : vector<16x32xf32>
    %16 = tpu.matmul %14, %15, %cst_10 {dimension_numbers = #tpu.dot_dimension_numbers<[1], [0], [0], [1], [0, 0, 1, 1], [], []>} : vector<16x128xf32>, vector<128x32xf32>, vector<16x32xf32> -> vector<16x32xf32>
    %c0_11 = arith.constant 0 : index
    %c0_12 = arith.constant 0 : index
    %17 = vector.load %arg6[%c0_11, %c0_12] : memref<1x32xf32, #tpu.memory_space<vmem>>, vector<1x32xf32>
    %18 = vector.broadcast %17 : vector<1x32xf32> to vector<16x32xf32>
    %19 = arith.addf %16, %18 : vector<16x32xf32>
    %c0_13 = arith.constant 0 : index
    %c0_14 = arith.constant 0 : index
    %20 = vector.load %arg2[%c0_13, %c0_14] : memref<16x32xf32, #tpu.memory_space<vmem>>, vector<16x32xf32>
    %21 = arith.addf %19, %20 : vector<16x32xf32>
    %c0_15 = arith.constant 0 : index
    %c0_16 = arith.constant 0 : index
    %22 = vector.load %arg7[%c0_15, %c0_16] : memref<16x32xf32, #tpu.memory_space<vmem>>, vector<16x32xf32>
    tpu.vector_store %arg7[%c0_15, %c0_16], %21 {strides = array<i32>} : memref<16x32xf32, #tpu.memory_space<vmem>>, vector<16x32xf32>,
    return
  }
  func.func @transform_0(%arg0: i32) -> (i32, i32) {
    %c0_i32 = arith.constant 0 : i32
    %c0_i32_0 = arith.constant 0 : i32
    return %arg0, %c0_i32 : i32, i32
  }
  func.func @transform_1(%arg0: i32) -> (i32, i32) {
    %c0_i32 = arith.constant 0 : i32
    %c0_i32_0 = arith.constant 0 : i32
    return %arg0, %c0_i32 : i32, i32
  }
  func.func @transform_2(%arg0: i32) -> (i32, i32) {
    %c0_i32 = arith.constant 0 : i32
    %c0_i32_0 = arith.constant 0 : i32
    %c0_i32_1 = arith.constant 0 : i32
    return %c0_i32, %c0_i32_0 : i32, i32
  }
  func.func @transform_3(%arg0: i32) -> (i32, i32) {
    %c0_i32 = arith.constant 0 : i32
    %c0_i32_0 = arith.constant 0 : i32
    %c0_i32_1 = arith.constant 0 : i32
    return %c0_i32, %c0_i32_0 : i32, i32
  }
  func.func @transform_4(%arg0: i32) -> (i32, i32) {
    %c0_i32 = arith.constant 0 : i32
    %c0_i32_0 = arith.constant 0 : i32
    %c0_i32_1 = arith.constant 0 : i32
    return %c0_i32, %c0_i32_0 : i32, i32
  }
  func.func @transform_5(%arg0: i32) -> (i32, i32) {
    %c0_i32 = arith.constant 0 : i32
    %c0_i32_0 = arith.constant 0 : i32
    %c0_i32_1 = arith.constant 0 : i32
    return %c0_i32, %c0_i32_0 : i32, i32
  }
  func.func @transform_6(%arg0: i32) -> (i32, i32) {
    %c0_i32 = arith.constant 0 : i32
    %c0_i32_0 = arith.constant 0 : i32
    return %arg0, %c0_i32 : i32, i32
  }
}

</mosaic_0001>

<llo_original>
// kernel: tpu_custom_call.1
$region0: #{tpu_custom_call.1}
  #allocation0 [shape = 'u32[]', space=smem, size = 0x4, offset = 0x4, fixed_abs, tag = 'smem constant byte address 0x4 - core index']
  #allocation1 [shape = 'u32[144,128]{1,0:T(1,128)}', space=vmem, size = 0x12000, scoped, tag = 'internal scratch']
  %s0 = inlined_call_operand.vmem [shape: f32[16,32], index: 0, kind: input, shape index: {}]
  %s1 = inlined_call_operand.vmem [shape: f32[16,32], index: 1, kind: input, shape index: {}]
  %s2 = inlined_call_operand.vmem [shape: f32[32,128], index: 2, kind: input, shape index: {}]
  %s3 = inlined_call_operand.vmem [shape: f32[1,128], index: 3, kind: input, shape index: {}]
  %s4 = inlined_call_operand.vmem [shape: f32[128,32], index: 4, kind: input, shape index: {}]
  %s5 = inlined_call_operand.vmem [shape: f32[1,32], index: 5, kind: input, shape index: {}]
  %s6 = inlined_call_operand.hbm [shape: f32[16,32], index: 6, kind: output, shape index: {}]
  %s7 = sld [smem:[#allocation0]]
  $region34: #{tpu_custom_call.1} parent=0
    _
  %s9 = ssub.s32 1, %s7
  %s10 = scalar_select 0, %s9, %s7
  $region1: #{tpu_custom_call.1} parent=0
    #allocation2 [shape = 'u8[8192]{0}', space=vmem, size = 0x2000, scoped, tag = 'output window, operand 0, single buffered']
    #allocation3 [shape = 's32[1]{0}', space=sflag, size = 0x4, scoped, tag = 'scoped memory for tpu_custom_call.1']
    %11 = vsyncpa [#allocation3], 0
    // Predicated region
    $region2: #{tpu_custom_call.1} parent=1 // pred_check
      _
    $region3: #{tpu_custom_call.1} parent=1 // pred_check_branch
      %13 = sbr.rel (0) target = $region5
    $region4: #{tpu_custom_call.1} parent=1 // pred_region
      _
    $region5: #{tpu_custom_call.1} parent=1 // pred_fallthru
      _
    // Predicated region
    $region6: #{tpu_custom_call.1} parent=1 // pred_check
      _
    $region7: #{tpu_custom_call.1} parent=1 // pred_check_branch
      %15 = sbr.rel (0) target = $region9
    $region8: #{tpu_custom_call.1} parent=1 // pred_region
      _
    $region9: #{tpu_custom_call.1} parent=1 // pred_fallthru
      _
    // Predicated region
    $region10: #{tpu_custom_call.1} parent=1 // pred_check
      _
    $region11: #{tpu_custom_call.1} parent=1 // pred_check_branch
      %17 = sbr.rel (0) target = $region13
    $region12: #{tpu_custom_call.1} parent=1 // pred_region
      _
    $region13: #{tpu_custom_call.1} parent=1 // pred_fallthru
      _
    // Predicated region
    $region14: #{tpu_custom_call.1} parent=1 // pred_check
      _
    $region15: #{tpu_custom_call.1} parent=1 // pred_check_branch
      %19 = sbr.rel (0) target = $region17
    $region16: #{tpu_custom_call.1} parent=1 // pred_region
      _
    $region17: #{tpu_custom_call.1} parent=1 // pred_fallthru
      _
    // Predicated region
    $region18: #{tpu_custom_call.1} parent=1 // pred_check
      _
    $region19: #{tpu_custom_call.1} parent=1 // pred_check_branch
      %21 = sbr.rel (0) target = $region21
    $region20: #{tpu_custom_call.1} parent=1 // pred_region
      _
    $region21: #{tpu_custom_call.1} parent=1 // pred_fallthru
      _
    // Predicated region
    $region22: #{tpu_custom_call.1} parent=1 // pred_check
      _
    $region23: #{tpu_custom_call.1} parent=1 // pred_check_branch
      %23 = sbr.rel (0) target = $region25
    $region24: #{tpu_custom_call.1} parent=1 // pred_region
      _
    $region25: #{tpu_custom_call.1} parent=1 // pred_fallthru
      _
    %v24 = vld [vmem:[%s0] sm:$0xff]
    %v25 = vld [vmem:[%s0 + $0x8] sm:$0xff]
    %v26 = vld [vmem:[%s2] sm:$0xff]
    %v27 = vld [vmem:[%s2 + $0x8] sm:$0xff]
    %v28 = vld [vmem:[%s2 + $0x10] sm:$0xff]
    %v29 = vld [vmem:[%s2 + $0x18] sm:$0xff]
    %v30 = vld [vmem:[%s3] sm:$0x1]
    %v32 = vlaneseq
    %v33 = vshrl.u32 %v32, 7
    %v34 = vsub.s32 0, %v33
    %v35 = vrot.slane %v30, %v34
    %vm37 = vcmask 261120
    %v39 = vsel %vm37, %v24, 0
    %v42 = vsel %vm37, %v25, 0
    %44 = vmatprep.subr.mxu0 0.0
    %45 = vmatpush1.msra.mxu0 %v26
    %46 = vmatprep.subr.mxu0 0.0
    %47 = vmatpush1.msra.mxu0 %v27
    %48 = vmatprep.subr.mxu0 0.0
    %49 = vmatpush1.msra.mxu0 %v28
    %50 = vmatprep.subr.mxu0 0.0
    %51 = vmatpush1.msra.mxu0 %v29
    %52 = vmatprep.subr.mxu0 0.0
    %53 = vmatpush1.msra.mxu0 0.0
    %54 = vmatprep.subr.mxu0 0.0
    %55 = vmatpush1.msra.mxu0 0.0
    %56 = vmatprep.subr.mxu0 0.0
    %57 = vmatpush1.msra.mxu0 0.0
    %58 = vmatprep.subr.mxu0 0.0
    %59 = vmatpush1.msra.mxu0 0.0
    %60 = vmatprep.subr.mxu0 0.0
    %61 = vmatpush1.msra.mxu0 0.0
    %62 = vmatprep.subr.mxu0 0.0
    %63 = vmatpush1.msra.mxu0 0.0
    %64 = vmatprep.subr.mxu0 0.0
    %65 = vmatpush1.msra.mxu0 0.0
    %66 = vmatprep.subr.mxu0 0.0
    %67 = vmatpush1.msra.mxu0 0.0
    %68 = vmatprep.subr.mxu0 0.0
    %69 = vmatpush1.msra.mxu0 0.0
    %70 = vmatprep.subr.mxu0 0.0
    %71 = vmatpush1.msra.mxu0 0.0
    %72 = vmatprep.subr.mxu0 0.0
    %73 = vmatpush1.msra.mxu0 0.0
    %74 = vmatprep.subr.mxu0 0.0
    %75 = vmatpush1.msra.mxu0 0.0
    %76 = vmatprep.subr.mxu0 0.0
    %77 = vmatpush1.msra.mxu0 0.0
    %78 = vmatprep.subr.mxu0 0.0
    %79 = vmatpush1.msra.mxu0 0.0
    %80 = vmatprep.subr.mxu0 0.0
    %81 = vmatpush1.msra.mxu0 0.0
    %82 = vmatprep.subr.mxu0 0.0
    %83 = vmatpush1.msra.mxu0 0.0
    %84 = vmatprep.subr.mxu0 0.0
    %85 = vmatpush1.msra.mxu0 0.0
    %86 = vmatprep.subr.mxu0 0.0
    %87 = vmatpush1.msra.mxu0 0.0
    %88 = vmatprep.subr.mxu0 0.0
    %89 = vmatpush1.msra.mxu0 0.0
    %90 = vmatprep.subr.mxu0 0.0
    %91 = vmatpush1.msra.mxu0 0.0
    %92 = vmatprep.subr.mxu0 0.0
    %93 = vmatpush1.msra.mxu0 0.0
    %94 = vmatprep.subr.mxu0 0.0
    %95 = vmatpush1.msra.mxu0 0.0
    %96 = vmatprep.subr.mxu0 0.0
    %97 = vmatpush1.msra.mxu0 0.0
    %98 = vmatprep.subr.mxu0 0.0
    %99 = vmatpush1.msra.mxu0 0.0
    %100 = vmatprep.subr.mxu0 0.0
    %101 = vmatpush1.msra.mxu0 0.0
    %102 = vmatprep.subr.mxu0 0.0
    %103 = vmatpush1.msra.mxu0 0.0
    %104 = vmatprep.subr.mxu0 0.0
    %105 = vmatpush1.msra.mxu0 0.0
    %106 = vmatprep.subr.mxu0 0.0
    %107 = vmatpush1.msra.mxu0 0.0
    %108 = vmatprep.mubr.f32.mxu0 0.0
    %109 = vmatmul.mubr.f32.gmra.mrb[0].mxu0 %v39
    %v110 = vpop.f32.mrb[0].mxu0
    %v111 = vadd.f32 %v35, %v110
    %v112 = vpop.f32.mrb[0].mxu0
    %113 = vmatprep.mubr.f32.mxu0 0.0
    %114 = vmatmul.mubr.f32.gmra.mrb[0].mxu0 %v42
    %v115 = vpop.f32.mrb[0].mxu0
    %v116 = vadd.f32 %v35, %v115
    %v117 = vpop.f32.mrb[0].mxu0
    %118 = vdwg.mxu0
    %v119 = vmul.f32 %v111, 0.5
    %v120 = vmul.f32 %v116, 0.5
    %v121 = vrcp.pop 1.4142135
    %v122 = vmul.f32 %v111, %v121
    %v123 = vmul.f32 %v116, %v121
    %v124 = verf.f32.pop %v122
    %v125 = verf.f32.pop %v123
    %v126 = vadd.f32 %v124, 1.0
    %v127 = vadd.f32 %v125, 1.0
    %v128 = vmul.f32 %v119, %v126
    %v129 = vmul.f32 %v120, %v127
    %v130 = vld [vmem:[%s4] sm:$0xff]
    %v131 = vld [vmem:[%s4 + $0x8] sm:$0xff]
    %v132 = vld [vmem:[%s4 + $0x10] sm:$0xff]
    %v133 = vld [vmem:[%s4 + $0x18] sm:$0xff]
    %v134 = vld [vmem:[%s4 + $0x20] sm:$0xff]
    %v135 = vld [vmem:[%s4 + $0x28] sm:$0xff]
    %v136 = vld [vmem:[%s4 + $0x30] sm:$0xff]
    %v137 = vld [vmem:[%s4 + $0x38] sm:$0xff]
    %v138 = vld [vmem:[%s4 + $0x40] sm:$0xff]
    %v139 = vld [vmem:[%s4 + $0x48] sm:$0xff]
    %v140 = vld [vmem:[%s4 + $0x50] sm:$0xff]
    %v141 = vld [vmem:[%s4 + $0x58] sm:$0xff]
    %v142 = vld [vmem:[%s4 + $0x60] sm:$0xff]
    %v143 = vld [vmem:[%s4 + $0x68] sm:$0xff]
    %v144 = vld [vmem:[%s4 + $0x70] sm:$0xff]
    %v145 = vld [vmem:[%s4 + $0x78] sm:$0xff]
    %v146 = vld [vmem:[%s5] sm:$0x1]
    %v148 = vlaneseq
    %v149 = vshrl.u32 %v148, 7
    %v150 = vsub.s32 0, %v149
    %v151 = vrot.slane %v146, %v150
    %153 = vmatprep.subr.mxu0 0.0
    %154 = vmatpush1.msra.mxu0 %v130
    %155 = vmatprep.subr.mxu0 0.0
    %156 = vmatpush1.msra.mxu0 %v131
    %157 = vmatprep.subr.mxu0 0.0
    %158 = vmatpush1.msra.mxu0 %v132
    %159 = vmatprep.subr.mxu0 0.0
    %160 = vmatpush1.msra.mxu0 %v133
    %161 = vmatprep.subr.mxu0 0.0
    %162 = vmatpush1.msra.mxu0 %v134
    %163 = vmatprep.subr.mxu0 0.0
    %164 = vmatpush1.msra.mxu0 %v135
    %165 = vmatprep.subr.mxu0 0.0
    %166 = vmatpush1.msra.mxu0 %v136
    %167 = vmatprep.subr.mxu0 0.0
    %168 = vmatpush1.msra.mxu0 %v137
    %169 = vmatprep.subr.mxu0 0.0
    %170 = vmatpush1.msra.mxu0 %v138
    %171 = vmatprep.subr.mxu0 0.0
    %172 = vmatpush1.msra.mxu0 %v139
    %173 = vmatprep.subr.mxu0 0.0
    %174 = vmatpush1.msra.mxu0 %v140
    %175 = vmatprep.subr.mxu0 0.0
    %176 = vmatpush1.msra.mxu0 %v141
    %177 = vmatprep.subr.mxu0 0.0
    %178 = vmatpush1.msra.mxu0 %v142
    %179 = vmatprep.subr.mxu0 0.0
    %180 = vmatpush1.msra.mxu0 %v143
    %181 = vmatprep.subr.mxu0 0.0
    %182 = vmatpush1.msra.mxu0 %v144
    %183 = vmatprep.subr.mxu0 0.0
    %184 = vmatpush1.msra.mxu0 %v145
    %185 = vmatprep.subr.mxu0 0.0
    %186 = vmatpush1.msra.mxu0 0.0
    %187 = vmatprep.subr.mxu0 0.0
    %188 = vmatpush1.msra.mxu0 0.0
    %189 = vmatprep.subr.mxu0 0.0
    %190 = vmatpush1.msra.mxu0 0.0
    %191 = vmatprep.subr.mxu0 0.0
    %192 = vmatpush1.msra.mxu0 0.0
    %193 = vmatprep.subr.mxu0 0.0
    %194 = vmatpush1.msra.mxu0 0.0
    %195 = vmatprep.subr.mxu0 0.0
    %196 = vmatpush1.msra.mxu0 0.0
    %197 = vmatprep.subr.mxu0 0.0
    %198 = vmatpush1.msra.mxu0 0.0
    %199 = vmatprep.subr.mxu0 0.0
    %200 = vmatpush1.msra.mxu0 0.0
    %201 = vmatprep.subr.mxu0 0.0
    %202 = vmatpush1.msra.mxu0 0.0
    %203 = vmatprep.subr.mxu0 0.0
    %204 = vmatpush1.msra.mxu0 0.0
    %205 = vmatprep.subr.mxu0 0.0
    %206 = vmatpush1.msra.mxu0 0.0
    %207 = vmatprep.subr.mxu0 0.0
    %208 = vmatpush1.msra.mxu0 0.0
    %209 = vmatprep.subr.mxu0 0.0
    %210 = vmatpush1.msra.mxu0 0.0
    %211 = vmatprep.subr.mxu0 0.0
    %212 = vmatpush1.msra.mxu0 0.0
    %213 = vmatprep.subr.mxu0 0.0
    %214 = vmatpush1.msra.mxu0 0.0
    %215 = vmatprep.subr.mxu0 0.0
    %216 = vmatpush1.msra.mxu0 0.0
    %217 = vmatprep.mubr.f32.mxu0 0.0
    %218 = vmatmul.mubr.f32.gmra.mrb[0].mxu0 %v128
    %v219 = vpop.f32.mrb[0].mxu0
    %v220 = vadd.f32 %v151, %v219
    %v221 = vpop.f32.mrb[0].mxu0
    %222 = vmatprep.mubr.f32.mxu0 0.0
    %223 = vmatmul.mubr.f32.gmra.mrb[0].mxu0 %v129
    %v224 = vpop.f32.mrb[0].mxu0
    %v225 = vadd.f32 %v151, %v224
    %v226 = vpop.f32.mrb[0].mxu0
    %227 = vdwg.mxu0
    %v228 = vld [vmem:[%s1] sm:$0xff]
    %v229 = vld [vmem:[%s1 + $0x8] sm:$0xff]
    %v230 = vadd.f32 %v220, %v228
    %v231 = vadd.f32 %v225, %v229
    %232 = vst.msk [vmem:[#allocation2] sm:$0xff] %vm37, %v230
    %233 = vst.msk [vmem:[#allocation2 + $0x8] sm:$0xff] %vm37, %v231
    // Predicated region
    $region26: #{tpu_custom_call.1} parent=1 // pred_check
      _
    $region27: #{tpu_custom_call.1} parent=1 // pred_check_branch
      %235 = sbr.rel (0) target = $region29
    $region28: #{tpu_custom_call.1} parent=1 // pred_region
      %s237 = ssub.s32 256, 256
      %238 = vsyncadd [#allocation3], %s237
      %s239 = sshll.u32 [#allocation2], 4
      %s240 = int_to_ptr.vmem [resolvable:$true] %s239
      %245 = dma.vmem_to_hbm [thread:$0]  %s240, 256, %s6, [#allocation3], 128, 128, 8
    $region29: #{tpu_custom_call.1} parent=1 // pred_fallthru
      _
    // Predicated region
    $region30: #{tpu_custom_call.1} parent=1 // pred_check
      _
    $region31: #{tpu_custom_call.1} parent=1 // pred_check_branch
      %247 = sbr.rel (0) target = $region33
    $region32: #{tpu_custom_call.1} parent=1 // pred_region
      %248 = dma.done [#allocation3], 256
    $region33: #{tpu_custom_call.1} parent=1 // pred_fallthru
      _
    %249 = vsyncpa [#allocation3], 1

</llo_original>
